<compile_context>
chip_gen: v7x
topology: tpu7x:2x2x1
jax: 0.10.0
libtpu: 0.0.40
codegen_flags: <defaults>
</compile_context>

<pallas_src>
import functools

import jax
import jax.numpy as jnp
from jax.experimental import pallas as pl
from jax.experimental.pallas import tpu as pltpu


def _pcl_kernel(protoT_ref, feat_ref, label_ref, out_ref, *,
                inv_temperature, ignore_label, stable_lse):
    feat = feat_ref[...].astype(jnp.float32)       # (tn, A)  cast in VMEM
    protoT = protoT_ref[...]                       # (A, C)   pre-normalized f32
    labels = label_ref[...]                        # (tn, 1)  int32

    # Un-normalized cosine numerators on the MXU.
    raw = jnp.dot(feat, protoT, preferred_element_type=jnp.float32)   # (tn, C)

    # Per-row scale = 1 / (||feat_row||_2 * T), applied to the narrow (tn, C)
    # logits instead of element-wise normalizing the wide (tn, A) features.
    sumsq = jnp.sum(feat * feat, axis=1, keepdims=True)               # (tn, 1)
    scale = jax.lax.rsqrt(jnp.maximum(sumsq, 1e-24)) * inv_temperature
    logits = raw * scale                                              # (tn, C)

    # Cross entropy per row: lse(logits) - logits[label].
    if stable_lse:
        row_max = jnp.max(logits, axis=1, keepdims=True)
        lse = row_max + jnp.log(jnp.sum(jnp.exp(logits - row_max),
                                        axis=1, keepdims=True))
    else:
        # |logits| <= 1/temperature (cosine sims), far from f32 overflow.
        lse = jnp.log(jnp.sum(jnp.exp(logits), axis=1, keepdims=True))

    class_ids = jax.lax.broadcasted_iota(jnp.int32, logits.shape, 1)  # (tn, C)
    onehot = (class_ids == labels).astype(jnp.float32)
    picked = jnp.sum(logits * onehot, axis=1, keepdims=True)          # (tn, 1)
    per_row = lse - picked                                            # (tn, 1)

    valid = labels != ignore_label                                    # (tn, 1)
    tile_sum = jnp.sum(jnp.where(valid, per_row, 0.0))
    tile_cnt = jnp.sum(valid.astype(jnp.float32))

    # Per-tile partial output block (8, 128): sum at [0, 0], count at [0, 1].
    sub = jax.lax.broadcasted_iota(jnp.int32, out_ref.shape, 0)
    lane = jax.lax.broadcasted_iota(jnp.int32, out_ref.shape, 1)
    out_ref[...] = jnp.where((sub == 0) & (lane == 0), tile_sum,
                             jnp.where((sub == 0) & (lane == 1), tile_cnt, 0.0))


def prototype_contrastive_loss(proto, feat, labels, *,
                               temperature=0.3, ignore_label=-1, tile_n=None):
    """JAX/Pallas equivalent of PrototypeContrastiveLoss.forward."""
    if feat.ndim != 2:
        a = feat.shape[1]
        # NCHW -> NHWC -> (BHW, A), matching the PyTorch permute/reshape.
        feat = jnp.transpose(feat, (0, 2, 3, 1)).reshape(-1, a)
    labels = labels.reshape(-1).astype(jnp.int32)

    N, A = feat.shape
    C = proto.shape[0]

    # Prototypes are tiny: normalize + transpose once, outside the grid loop.
    proto_f32 = proto.astype(jnp.float32)
    p_norm = jnp.sqrt(jnp.sum(proto_f32 * proto_f32, axis=1, keepdims=True))
    protoT_n = (proto_f32 / jnp.maximum(p_norm, 1e-12)).T            # (A, C)

    # Pick a large feat tile: ~4 MiB per buffer, multiple of 8, and no larger
    # than the (sublane-rounded) problem itself.
    if tile_n is None:
        itemsize = jnp.dtype(feat.dtype).itemsize
        tile_n = (4 * 1024 * 1024) // max(1, A * itemsize)
        tile_n = int(max(256, min(2048, tile_n)))
        tile_n = (tile_n // 8) * 8
    n_rounded = ((N + 7) // 8) * 8
    tile_n = int(max(8, min(tile_n, n_rounded)))

    # Pad N up to a multiple of tile_n with ignored rows (contribute nothing).
    pad = (-N) % tile_n
    if pad:
        feat = jnp.concatenate([feat, jnp.zeros((pad, A), feat.dtype)], axis=0)
        labels = jnp.concatenate(
            [labels, jnp.full((pad,), ignore_label, jnp.int32)], axis=0)
    Np = feat.shape[0]
    labels2d = labels.reshape(Np, 1)
    num_tiles = Np // tile_n

    kernel = functools.partial(
        _pcl_kernel,
        inv_temperature=float(1.0 / temperature),
        ignore_label=int(ignore_label),
        # Skip the max-subtraction only when it is provably safe.
        stable_lse=bool(temperature < 0.05))

    partials = pl.pallas_call(
        kernel,
        out_shape=jax.ShapeDtypeStruct((num_tiles * 8, 128), jnp.float32),
        grid_spec=pltpu.PrefetchScalarGridSpec(
            num_scalar_prefetch=0,
            grid=(num_tiles,),
            in_specs=[
                pl.BlockSpec((A, C), lambda i: (0, 0)),        # protoT (resident)
                pl.BlockSpec((tile_n, A), lambda i: (i, 0)),   # feat tile (native dtype)
                pl.BlockSpec((tile_n, 1), lambda i: (i, 0)),   # labels tile
            ],
            out_specs=pl.BlockSpec((8, 128), lambda i: (i, 0)),
        ),
        compiler_params=pltpu.CompilerParams(
            dimension_semantics=("parallel",),        # no cross-tile carry
            vmem_limit_bytes=32 * 1024 * 1024),
    )(protoT_n, feat, labels2d)

    partials = partials.reshape(num_tiles, 8, 128)
    loss_sum = jnp.sum(partials[:, 0, 0])
    valid_cnt = jnp.sum(partials[:, 0, 1])
    # Mean over valid (non-ignored) rows, like nn.CrossEntropyLoss().
    return loss_sum / valid_cnt


def _reference_loss(proto, feat, labels, temperature=0.3, ignore_label=-1):
    """Pure-JAX reference mirroring the PyTorch module, for sanity checking."""
    if feat.ndim != 2:
        a = feat.shape[1]
        feat = jnp.transpose(feat, (0, 2, 3, 1)).reshape(-1, a)
    labels = labels.reshape(-1)
    mask = labels != ignore_label
    feat_n = feat / jnp.maximum(
        jnp.linalg.norm(feat, axis=1, keepdims=True), 1e-12)
    proto_n = proto / jnp.maximum(
        jnp.linalg.norm(proto, axis=1, keepdims=True), 1e-12)
    logits = feat_n @ proto_n.T / temperature
    lse = jax.scipy.special.logsumexp(logits, axis=1)
    safe_labels = jnp.where(mask, labels, 0)
    picked = jnp.take_along_axis(logits, safe_labels[:, None], axis=1)[:, 0]
    per_row = lse - picked
    return jnp.sum(jnp.where(mask, per_row, 0.0)) / jnp.sum(mask)


if __name__ == "__main__":
    key = jax.random.PRNGKey(0)
    k1, k2, k3 = jax.random.split(key, 3)

    B, A, H, W = 2, 32, 8, 8          # feat: NCHW, channels = feature dim A
    C = 5                             # number of prototype classes
    ignore_label = -1

    proto = jax.random.normal(k1, (C, A), dtype=jnp.float32)
    feat = jax.random.normal(k2, (B, A, H, W), dtype=jnp.float32)
    # labels in {-1, 0, ..., C-1}; -1 is ignored
    labels = jax.random.randint(k3, (B, H, W), minval=-1, maxval=C,
                                dtype=jnp.int32)

    loss = prototype_contrastive_loss(proto, feat, labels,
                                      temperature=0.3,
                                      ignore_label=ignore_label)
    loss = jax.block_until_ready(loss)

    ref = jax.block_until_ready(
        _reference_loss(proto, feat, labels, 0.3, ignore_label))

    assert jnp.isfinite(loss), "loss is not finite"
    assert abs(float(loss) - float(ref)) < 1e-4, (float(loss), float(ref))

    # Also exercise the bf16 streaming path (native-dtype feat, looser tol).
    loss_bf16 = jax.block_until_ready(
        prototype_contrastive_loss(proto, feat.astype(jnp.bfloat16), labels,
                                   temperature=0.3,
                                   ignore_label=ignore_label))
    assert jnp.isfinite(loss_bf16), "bf16 loss is not finite"
    assert abs(float(loss_bf16) - float(ref)) < 5e-2, (float(loss_bf16),
                                                       float(ref))
    print("KERNEL_OK")
</pallas_src>

<mosaic_0001>
module attributes {stable_mosaic.version = 11 : i64} {
  func.func @_pcl_kernel(%arg0: i32, %arg1: memref<32x5xf32, #tpu.memory_space<vmem>>, %arg2: memref<128x32xf32, #tpu.memory_space<vmem>>, %arg3: memref<128x1xi32, #tpu.memory_space<vmem>>, %arg4: memref<8x128xf32, #tpu.memory_space<vmem>>) attributes {dimension_semantics = [#tpu.dimension_semantics<parallel>], iteration_bounds = array<i64: 1>, scalar_prefetch = 0 : i64, scratch_operands = 0 : i64, tpu.core_type = #tpu.core_type<tc>, window_params = [{pipeline_mode = #tpu.pipeline_mode<synchronous>, transform_indices = @transform_0, window_bounds = array<i64: 32, 5>}, {transform_indices = @transform_1, window_bounds = array<i64: 128, 32>}, {transform_indices = @transform_2, window_bounds = array<i64: 128, 1>}, {transform_indices = @transform_3, window_bounds = array<i64: 8, 128>}]} {
    %c0 = arith.constant 0 : index
    %c0_0 = arith.constant 0 : index
    %0 = vector.load %arg2[%c0, %c0_0] : memref<128x32xf32, #tpu.memory_space<vmem>>, vector<128x32xf32>
    %c0_1 = arith.constant 0 : index
    %c0_2 = arith.constant 0 : index
    %1 = vector.load %arg1[%c0_1, %c0_2] : memref<32x5xf32, #tpu.memory_space<vmem>>, vector<32x5xf32>
    %c0_3 = arith.constant 0 : index
    %c0_4 = arith.constant 0 : index
    %2 = vector.load %arg3[%c0_3, %c0_4] : memref<128x1xi32, #tpu.memory_space<vmem>>, vector<128x1xi32>
    %cst = arith.constant dense<0.000000e+00> : vector<128x5xf32>
    %3 = tpu.matmul %0, %1, %cst {dimension_numbers = #tpu.dot_dimension_numbers<[1], [0], [0], [1], [0, 0, 1, 1], [], []>} : vector<128x32xf32>, vector<32x5xf32>, vector<128x5xf32> -> vector<128x5xf32>
    %4 = arith.mulf %0, %0 : vector<128x32xf32>
    %cst_5 = arith.constant dense<0.000000e+00> : vector<128xf32>
    %5 = vector.multi_reduction <add>, %4, %cst_5 [1] : vector<128x32xf32> to vector<128xf32>
    %6 = vector.shape_cast %5 : vector<128xf32> to vector<128x1xf32>
    %cst_6 = arith.constant 1.000000e-24 : f32
    %7 = vector.broadcast %cst_6 : f32 to vector<128x1xf32>
    %8 = arith.maximumf %6, %7 : vector<128x1xf32>
    %9 = math.rsqrt %8 : vector<128x1xf32>
    %cst_7 = arith.constant 3.33333325 : f32
    %10 = vector.broadcast %cst_7 : f32 to vector<128x1xf32>
    %11 = arith.mulf %9, %10 : vector<128x1xf32>
    %12 = vector.broadcast %11 : vector<128x1xf32> to vector<128x5xf32>
    %13 = arith.mulf %3, %12 : vector<128x5xf32>
    %14 = math.exp %13 : vector<128x5xf32>
    %cst_8 = arith.constant dense<0.000000e+00> : vector<128xf32>
    %15 = vector.multi_reduction <add>, %14, %cst_8 [1] : vector<128x5xf32> to vector<128xf32>
    %16 = vector.shape_cast %15 : vector<128xf32> to vector<128x1xf32>
    %17 = math.log %16 : vector<128x1xf32>
    %18 = tpu.iota {dimensions = array<i32: 1>} : vector<128x5xi32>
    %19 = vector.broadcast %2 : vector<128x1xi32> to vector<128x5xi32>
    %20 = arith.cmpi eq, %18, %19 : vector<128x5xi32>
    %21 = arith.extui %20 : vector<128x5xi1> to vector<128x5xi32>
    %22 = arith.sitofp %21 : vector<128x5xi32> to vector<128x5xf32>
    %23 = arith.mulf %13, %22 : vector<128x5xf32>
    %cst_9 = arith.constant dense<0.000000e+00> : vector<128xf32>
    %24 = vector.multi_reduction <add>, %23, %cst_9 [1] : vector<128x5xf32> to vector<128xf32>
    %25 = vector.shape_cast %24 : vector<128xf32> to vector<128x1xf32>
    %26 = arith.subf %17, %25 : vector<128x1xf32>
    %c-1_i32 = arith.constant -1 : i32
    %27 = vector.broadcast %c-1_i32 : i32 to vector<128x1xi32>
    %28 = arith.cmpi ne, %2, %27 : vector<128x1xi32>
    %cst_10 = arith.constant 0.000000e+00 : f32
    %29 = vector.broadcast %cst_10 : f32 to vector<128x1xf32>
    %30 = arith.select %28, %26, %29 : vector<128x1xi1>, vector<128x1xf32>
    %31 = vector.shape_cast %30 : vector<128x1xf32> to vector<1x128x1xf32>
    %cst_11 = arith.constant dense<0.000000e+00> : vector<1xf32>
    %32 = vector.multi_reduction <add>, %31, %cst_11 [1, 2] : vector<1x128x1xf32> to vector<1xf32>
    %33 = vector.shape_cast %32 : vector<1xf32> to vector<1x1x1xf32>
    %34 = vector.extract %33[0, 0, 0] : f32 from vector<1x1x1xf32>
    %35 = arith.extui %28 : vector<128x1xi1> to vector<128x1xi32>
    %36 = arith.sitofp %35 : vector<128x1xi32> to vector<128x1xf32>
    %37 = vector.shape_cast %36 : vector<128x1xf32> to vector<1x128x1xf32>
    %cst_12 = arith.constant dense<0.000000e+00> : vector<1xf32>
    %38 = vector.multi_reduction <add>, %37, %cst_12 [1, 2] : vector<1x128x1xf32> to vector<1xf32>
    %39 = vector.shape_cast %38 : vector<1xf32> to vector<1x1x1xf32>
    %40 = vector.extract %39[0, 0, 0] : f32 from vector<1x1x1xf32>
    %41 = tpu.iota {dimensions = array<i32: 0>} : vector<8x128xi32>
    %42 = tpu.iota {dimensions = array<i32: 1>} : vector<8x128xi32>
    %c0_i32 = arith.constant 0 : i32
    %43 = vector.broadcast %c0_i32 : i32 to vector<8x128xi32>
    %44 = arith.cmpi eq, %41, %43 : vector<8x128xi32>
    %c0_i32_13 = arith.constant 0 : i32
    %45 = vector.broadcast %c0_i32_13 : i32 to vector<8x128xi32>
    %46 = arith.cmpi eq, %42, %45 : vector<8x128xi32>
    %47 = arith.andi %44, %46 : vector<8x128xi1>
    %c0_i32_14 = arith.constant 0 : i32
    %48 = vector.broadcast %c0_i32_14 : i32 to vector<8x128xi32>
    %49 = arith.cmpi eq, %41, %48 : vector<8x128xi32>
    %c1_i32 = arith.constant 1 : i32
    %50 = vector.broadcast %c1_i32 : i32 to vector<8x128xi32>
    %51 = arith.cmpi eq, %42, %50 : vector<8x128xi32>
    %52 = arith.andi %49, %51 : vector<8x128xi1>
    %cst_15 = arith.constant 0.000000e+00 : f32
    %53 = vector.broadcast %40 : f32 to vector<8x128xf32>
    %54 = vector.broadcast %cst_15 : f32 to vector<8x128xf32>
    %55 = arith.select %52, %53, %54 : vector<8x128xi1>, vector<8x128xf32>
    %56 = vector.broadcast %34 : f32 to vector<8x128xf32>
    %57 = arith.select %47, %56, %55 : vector<8x128xi1>, vector<8x128xf32>
    %c0_16 = arith.constant 0 : index
    %c0_17 = arith.constant 0 : index
    %58 = vector.load %arg4[%c0_16, %c0_17] : memref<8x128xf32, #tpu.memory_space<vmem>>, vector<8x128xf32>
    tpu.vector_store %arg4[%c0_16, %c0_17], %57 {strides = array<i32>} : memref<8x128xf32, #tpu.memory_space<vmem>>, vector<8x128xf32>,
    return
  }
  func.func @transform_0(%arg0: i32) -> (i32, i32) {
    %c0_i32 = arith.constant 0 : i32
    %c0_i32_0 = arith.constant 0 : i32
    %c0_i32_1 = arith.constant 0 : i32
    return %c0_i32, %c0_i32_0 : i32, i32
  }
  func.func @transform_1(%arg0: i32) -> (i32, i32) {
    %c0_i32 = arith.constant 0 : i32
    %c0_i32_0 = arith.constant 0 : i32
    return %arg0, %c0_i32 : i32, i32
  }
  func.func @transform_2(%arg0: i32) -> (i32, i32) {
    %c0_i32 = arith.constant 0 : i32
    %c0_i32_0 = arith.constant 0 : i32
    return %arg0, %c0_i32 : i32, i32
  }
  func.func @transform_3(%arg0: i32) -> (i32, i32) {
    %c0_i32 = arith.constant 0 : i32
    %c0_i32_0 = arith.constant 0 : i32
    return %arg0, %c0_i32 : i32, i32
  }
}

</mosaic_0001>

<llo_original>
// kernel: tpu_custom_call.1
$region0: #{tpu_custom_call.1}
  #allocation0 [shape = 'u32[]', space=smem, size = 0x4, offset = 0x4, fixed_abs, tag = 'smem constant byte address 0x4 - core index']
  #allocation1 [shape = 'u32[144,128]{1,0:T(1,128)}', space=vmem, size = 0x12000, scoped, tag = 'internal scratch']
  %s0 = inlined_call_operand.vmem [shape: f32[32,5], index: 0, kind: input, shape index: {}]
  %s1 = inlined_call_operand.vmem [shape: f32[128,32], index: 1, kind: input, shape index: {}]
  %s2 = inlined_call_operand.vmem [shape: s32[128,1], index: 2, kind: input, shape index: {}]
  %s3 = inlined_call_operand.hbm [shape: f32[8,128], index: 3, kind: output, shape index: {}]
  %s4 = sld [smem:[#allocation0]]
  $region22: #{tpu_custom_call.1} parent=0
    _
  %s6 = ssub.s32 1, %s4
  %s7 = scalar_select 0, %s6, %s4
  $region1: #{tpu_custom_call.1} parent=0
    #allocation2 [shape = 'u8[4096]{0}', space=vmem, size = 0x1000, scoped, tag = 'output window, operand 0, single buffered']
    #allocation3 [shape = 's32[1]{0}', space=sflag, size = 0x4, scoped, tag = 'scoped memory for tpu_custom_call.1']
    %8 = vsyncpa [#allocation3], 0
    // Predicated region
    $region2: #{tpu_custom_call.1} parent=1 // pred_check
      _
    $region3: #{tpu_custom_call.1} parent=1 // pred_check_branch
      %10 = sbr.rel (0) target = $region5
    $region4: #{tpu_custom_call.1} parent=1 // pred_region
      _
    $region5: #{tpu_custom_call.1} parent=1 // pred_fallthru
      _
    // Predicated region
    $region6: #{tpu_custom_call.1} parent=1 // pred_check
      _
    $region7: #{tpu_custom_call.1} parent=1 // pred_check_branch
      %12 = sbr.rel (0) target = $region9
    $region8: #{tpu_custom_call.1} parent=1 // pred_region
      _
    $region9: #{tpu_custom_call.1} parent=1 // pred_fallthru
      _
    // Predicated region
    $region10: #{tpu_custom_call.1} parent=1 // pred_check
      _
    $region11: #{tpu_custom_call.1} parent=1 // pred_check_branch
      %14 = sbr.rel (0) target = $region13
    $region12: #{tpu_custom_call.1} parent=1 // pred_region
      _
    $region13: #{tpu_custom_call.1} parent=1 // pred_fallthru
      _
    %v15 = vld [vmem:[%s1] sm:$0xff]
    %v16 = vld [vmem:[%s1 + $0x8] sm:$0xff]
    %v17 = vld [vmem:[%s1 + $0x10] sm:$0xff]
    %v18 = vld [vmem:[%s1 + $0x18] sm:$0xff]
    %v19 = vld [vmem:[%s1 + $0x20] sm:$0xff]
    %v20 = vld [vmem:[%s1 + $0x28] sm:$0xff]
    %v21 = vld [vmem:[%s1 + $0x30] sm:$0xff]
    %v22 = vld [vmem:[%s1 + $0x38] sm:$0xff]
    %v23 = vld [vmem:[%s1 + $0x40] sm:$0xff]
    %v24 = vld [vmem:[%s1 + $0x48] sm:$0xff]
    %v25 = vld [vmem:[%s1 + $0x50] sm:$0xff]
    %v26 = vld [vmem:[%s1 + $0x58] sm:$0xff]
    %v27 = vld [vmem:[%s1 + $0x60] sm:$0xff]
    %v28 = vld [vmem:[%s1 + $0x68] sm:$0xff]
    %v29 = vld [vmem:[%s1 + $0x70] sm:$0xff]
    %v30 = vld [vmem:[%s1 + $0x78] sm:$0xff]
    %v31 = vld [vmem:[%s0] sm:$0xff]
    %v32 = vld [vmem:[%s0 + $0x8] sm:$0xff]
    %v33 = vld [vmem:[%s0 + $0x10] sm:$0xff]
    %v34 = vld [vmem:[%s0 + $0x18] sm:$0xff]
    %v35 = vld [vmem:[%s2] sm:$0xff]
    %v36 = vld [vmem:[%s2 + $0x8] sm:$0xff]
    %v37 = vld [vmem:[%s2 + $0x10] sm:$0xff]
    %v38 = vld [vmem:[%s2 + $0x18] sm:$0xff]
    %v39 = vld [vmem:[%s2 + $0x20] sm:$0xff]
    %v40 = vld [vmem:[%s2 + $0x28] sm:$0xff]
    %v41 = vld [vmem:[%s2 + $0x30] sm:$0xff]
    %v42 = vld [vmem:[%s2 + $0x38] sm:$0xff]
    %v43 = vld [vmem:[%s2 + $0x40] sm:$0xff]
    %v44 = vld [vmem:[%s2 + $0x48] sm:$0xff]
    %v45 = vld [vmem:[%s2 + $0x50] sm:$0xff]
    %v46 = vld [vmem:[%s2 + $0x58] sm:$0xff]
    %v47 = vld [vmem:[%s2 + $0x60] sm:$0xff]
    %v48 = vld [vmem:[%s2 + $0x68] sm:$0xff]
    %v49 = vld [vmem:[%s2 + $0x70] sm:$0xff]
    %v50 = vld [vmem:[%s2 + $0x78] sm:$0xff]
    %vm51 = vcmask 261120
    %v53 = vsel %vm51, %v15, 0
    %v56 = vsel %vm51, %v16, 0
    %v59 = vsel %vm51, %v17, 0
    %v62 = vsel %vm51, %v18, 0
    %v65 = vsel %vm51, %v19, 0
    %v68 = vsel %vm51, %v20, 0
    %v71 = vsel %vm51, %v21, 0
    %v74 = vsel %vm51, %v22, 0
    %v77 = vsel %vm51, %v23, 0
    %v80 = vsel %vm51, %v24, 0
    %v83 = vsel %vm51, %v25, 0
    %v86 = vsel %vm51, %v26, 0
    %v89 = vsel %vm51, %v27, 0
    %v92 = vsel %vm51, %v28, 0
    %v95 = vsel %vm51, %v29, 0
    %v98 = vsel %vm51, %v30, 0
    %100 = vmatprep.subr.mxu0 0.0
    %101 = vmatpush1.msra.mxu0 %v31
    %102 = vmatprep.subr.mxu0 0.0
    %103 = vmatpush1.msra.mxu0 %v32
    %104 = vmatprep.subr.mxu0 0.0
    %105 = vmatpush1.msra.mxu0 %v33
    %106 = vmatprep.subr.mxu0 0.0
    %107 = vmatpush1.msra.mxu0 %v34
    %108 = vmatprep.subr.mxu0 0.0
    %109 = vmatpush1.msra.mxu0 0.0
    %110 = vmatprep.subr.mxu0 0.0
    %111 = vmatpush1.msra.mxu0 0.0
    %112 = vmatprep.subr.mxu0 0.0
    %113 = vmatpush1.msra.mxu0 0.0
    %114 = vmatprep.subr.mxu0 0.0
    %115 = vmatpush1.msra.mxu0 0.0
    %116 = vmatprep.subr.mxu0 0.0
    %117 = vmatpush1.msra.mxu0 0.0
    %118 = vmatprep.subr.mxu0 0.0
    %119 = vmatpush1.msra.mxu0 0.0
    %120 = vmatprep.subr.mxu0 0.0
    %121 = vmatpush1.msra.mxu0 0.0
    %122 = vmatprep.subr.mxu0 0.0
    %123 = vmatpush1.msra.mxu0 0.0
    %124 = vmatprep.subr.mxu0 0.0
    %125 = vmatpush1.msra.mxu0 0.0
    %126 = vmatprep.subr.mxu0 0.0
    %127 = vmatpush1.msra.mxu0 0.0
    %128 = vmatprep.subr.mxu0 0.0
    %129 = vmatpush1.msra.mxu0 0.0
    %130 = vmatprep.subr.mxu0 0.0
    %131 = vmatpush1.msra.mxu0 0.0
    %132 = vmatprep.subr.mxu0 0.0
    %133 = vmatpush1.msra.mxu0 0.0
    %134 = vmatprep.subr.mxu0 0.0
    %135 = vmatpush1.msra.mxu0 0.0
    %136 = vmatprep.subr.mxu0 0.0
    %137 = vmatpush1.msra.mxu0 0.0
    %138 = vmatprep.subr.mxu0 0.0
    %139 = vmatpush1.msra.mxu0 0.0
    %140 = vmatprep.subr.mxu0 0.0
    %141 = vmatpush1.msra.mxu0 0.0
    %142 = vmatprep.subr.mxu0 0.0
    %143 = vmatpush1.msra.mxu0 0.0
    %144 = vmatprep.subr.mxu0 0.0
    %145 = vmatpush1.msra.mxu0 0.0
    %146 = vmatprep.subr.mxu0 0.0
    %147 = vmatpush1.msra.mxu0 0.0
    %148 = vmatprep.subr.mxu0 0.0
    %149 = vmatpush1.msra.mxu0 0.0
    %150 = vmatprep.subr.mxu0 0.0
    %151 = vmatpush1.msra.mxu0 0.0
    %152 = vmatprep.subr.mxu0 0.0
    %153 = vmatpush1.msra.mxu0 0.0
    %154 = vmatprep.subr.mxu0 0.0
    %155 = vmatpush1.msra.mxu0 0.0
    %156 = vmatprep.subr.mxu0 0.0
    %157 = vmatpush1.msra.mxu0 0.0
    %158 = vmatprep.subr.mxu0 0.0
    %159 = vmatpush1.msra.mxu0 0.0
    %160 = vmatprep.subr.mxu0 0.0
    %161 = vmatpush1.msra.mxu0 0.0
    %162 = vmatprep.subr.mxu0 0.0
    %163 = vmatpush1.msra.mxu0 0.0
    %164 = vmatprep.mubr.f32.mxu0 0.0
    %165 = vmatmul.mubr.f32.gmra.mrb[0].mxu0 %v53
    %v166 = vpop.f32.mrb[0].mxu0
    %v167 = vadd.f32 0.0, %v166
    %v168 = vpop.f32.mrb[0].mxu0
    %169 = vmatprep.mubr.f32.mxu0 0.0
    %170 = vmatmul.mubr.f32.gmra.mrb[0].mxu0 %v56
    %v171 = vpop.f32.mrb[0].mxu0
    %v172 = vadd.f32 0.0, %v171
    %v173 = vpop.f32.mrb[0].mxu0
    %174 = vmatprep.mubr.f32.mxu0 0.0
    %175 = vmatmul.mubr.f32.gmra.mrb[0].mxu0 %v59
    %v176 = vpop.f32.mrb[0].mxu0
    %v177 = vadd.f32 0.0, %v176
    %v178 = vpop.f32.mrb[0].mxu0
    %179 = vmatprep.mubr.f32.mxu0 0.0
    %180 = vmatmul.mubr.f32.gmra.mrb[0].mxu0 %v62
    %v181 = vpop.f32.mrb[0].mxu0
    %v182 = vadd.f32 0.0, %v181
    %v183 = vpop.f32.mrb[0].mxu0
    %184 = vmatprep.mubr.f32.mxu0 0.0
    %185 = vmatmul.mubr.f32.gmra.mrb[0].mxu0 %v65
    %v186 = vpop.f32.mrb[0].mxu0
    %v187 = vadd.f32 0.0, %v186
    %v188 = vpop.f32.mrb[0].mxu0
    %189 = vmatprep.mubr.f32.mxu0 0.0
    %190 = vmatmul.mubr.f32.gmra.mrb[0].mxu0 %v68
    %v191 = vpop.f32.mrb[0].mxu0
    %v192 = vadd.f32 0.0, %v191
    %v193 = vpop.f32.mrb[0].mxu0
    %194 = vmatprep.mubr.f32.mxu0 0.0
    %195 = vmatmul.mubr.f32.gmra.mrb[0].mxu0 %v71
    %v196 = vpop.f32.mrb[0].mxu0
    %v197 = vadd.f32 0.0, %v196
    %v198 = vpop.f32.mrb[0].mxu0
    %199 = vmatprep.mubr.f32.mxu0 0.0
    %200 = vmatmul.mubr.f32.gmra.mrb[0].mxu0 %v74
    %v201 = vpop.f32.mrb[0].mxu0
    %v202 = vadd.f32 0.0, %v201
    %v203 = vpop.f32.mrb[0].mxu0
    %204 = vmatprep.mubr.f32.mxu0 0.0
    %205 = vmatmul.mubr.f32.gmra.mrb[0].mxu0 %v77
    %v206 = vpop.f32.mrb[0].mxu0
    %v207 = vadd.f32 0.0, %v206
    %v208 = vpop.f32.mrb[0].mxu0
    %209 = vmatprep.mubr.f32.mxu0 0.0
    %210 = vmatmul.mubr.f32.gmra.mrb[0].mxu0 %v80
    %v211 = vpop.f32.mrb[0].mxu0
    %v212 = vadd.f32 0.0, %v211
    %v213 = vpop.f32.mrb[0].mxu0
    %214 = vmatprep.mubr.f32.mxu0 0.0
    %215 = vmatmul.mubr.f32.gmra.mrb[0].mxu0 %v83
    %v216 = vpop.f32.mrb[0].mxu0
    %v217 = vadd.f32 0.0, %v216
    %v218 = vpop.f32.mrb[0].mxu0
    %219 = vmatprep.mubr.f32.mxu0 0.0
    %220 = vmatmul.mubr.f32.gmra.mrb[0].mxu0 %v86
    %v221 = vpop.f32.mrb[0].mxu0
    %v222 = vadd.f32 0.0, %v221
    %v223 = vpop.f32.mrb[0].mxu0
    %224 = vmatprep.mubr.f32.mxu0 0.0
    %225 = vmatmul.mubr.f32.gmra.mrb[0].mxu0 %v89
    %v226 = vpop.f32.mrb[0].mxu0
    %v227 = vadd.f32 0.0, %v226
    %v228 = vpop.f32.mrb[0].mxu0
    %229 = vmatprep.mubr.f32.mxu0 0.0
    %230 = vmatmul.mubr.f32.gmra.mrb[0].mxu0 %v92
    %v231 = vpop.f32.mrb[0].mxu0
    %v232 = vadd.f32 0.0, %v231
    %v233 = vpop.f32.mrb[0].mxu0
    %234 = vmatprep.mubr.f32.mxu0 0.0
    %235 = vmatmul.mubr.f32.gmra.mrb[0].mxu0 %v95
    %v236 = vpop.f32.mrb[0].mxu0
    %v237 = vadd.f32 0.0, %v236
    %v238 = vpop.f32.mrb[0].mxu0
    %239 = vmatprep.mubr.f32.mxu0 0.0
    %240 = vmatmul.mubr.f32.gmra.mrb[0].mxu0 %v98
    %v241 = vpop.f32.mrb[0].mxu0
    %v242 = vadd.f32 0.0, %v241
    %v243 = vpop.f32.mrb[0].mxu0
    %244 = vdwg.mxu0
    %v245 = vmul.f32 %v15, %v15
    %v246 = vmul.f32 %v16, %v16
    %v247 = vmul.f32 %v17, %v17
    %v248 = vmul.f32 %v18, %v18
    %v249 = vmul.f32 %v19, %v19
    %v250 = vmul.f32 %v20, %v20
    %v251 = vmul.f32 %v21, %v21
    %v252 = vmul.f32 %v22, %v22
    %v253 = vmul.f32 %v23, %v23
    %v254 = vmul.f32 %v24, %v24
    %v255 = vmul.f32 %v25, %v25
    %v256 = vmul.f32 %v26, %v26
    %v257 = vmul.f32 %v27, %v27
    %v258 = vmul.f32 %v28, %v28
    %v259 = vmul.f32 %v29, %v29
    %v260 = vmul.f32 %v30, %v30
    %v261 = vsel %vm51, %v245, 0.0
    %262 = vadd.xlane.f32.xlu0 %v261
    %v263 = vpop.xlane.xlu0 %262
    %v264 = vsel %vm51, %v246, 0.0
    %265 = vadd.xlane.f32.xlu0 %v264
    %v266 = vpop.xlane.xlu0 %265
    %v267 = vsel %vm51, %v247, 0.0
    %268 = vadd.xlane.f32.xlu0 %v267
    %v269 = vpop.xlane.xlu0 %268
    %v270 = vsel %vm51, %v248, 0.0
    %271 = vadd.xlane.f32.xlu0 %v270
    %v272 = vpop.xlane.xlu0 %271
    %v273 = vsel %vm51, %v249, 0.0
    %274 = vadd.xlane.f32.xlu0 %v273
    %v275 = vpop.xlane.xlu0 %274
    %v276 = vsel %vm51, %v250, 0.0
    %277 = vadd.xlane.f32.xlu0 %v276
    %v278 = vpop.xlane.xlu0 %277
    %v279 = vsel %vm51, %v251, 0.0
    %280 = vadd.xlane.f32.xlu0 %v279
    %v281 = vpop.xlane.xlu0 %280
    %v282 = vsel %vm51, %v252, 0.0
    %283 = vadd.xlane.f32.xlu0 %v282
    %v284 = vpop.xlane.xlu0 %283
    %v285 = vsel %vm51, %v253, 0.0
    %286 = vadd.xlane.f32.xlu0 %v285
    %v287 = vpop.xlane.xlu0 %286
    %v288 = vsel %vm51, %v254, 0.0
    %289 = vadd.xlane.f32.xlu0 %v288
    %v290 = vpop.xlane.xlu0 %289
    %v291 = vsel %vm51, %v255, 0.0
    %292 = vadd.xlane.f32.xlu0 %v291
    %v293 = vpop.xlane.xlu0 %292
    %v294 = vsel %vm51, %v256, 0.0
    %295 = vadd.xlane.f32.xlu0 %v294
    %v296 = vpop.xlane.xlu0 %295
    %v297 = vsel %vm51, %v257, 0.0
    %298 = vadd.xlane.f32.xlu0 %v297
    %v299 = vpop.xlane.xlu0 %298
    %v300 = vsel %vm51, %v258, 0.0
    %301 = vadd.xlane.f32.xlu0 %v300
    %v302 = vpop.xlane.xlu0 %301
    %v303 = vsel %vm51, %v259, 0.0
    %304 = vadd.xlane.f32.xlu0 %v303
    %v305 = vpop.xlane.xlu0 %304
    %v306 = vsel %vm51, %v260, 0.0
    %307 = vadd.xlane.f32.xlu0 %v306
    %v308 = vpop.xlane.xlu0 %307
    %v309 = vmax.f32 %v263, 1e-24
    %v310 = vmax.f32 %v266, 1e-24
    %v311 = vmax.f32 %v269, 1e-24
    %v312 = vmax.f32 %v272, 1e-24
    %v313 = vmax.f32 %v275, 1e-24
    %v314 = vmax.f32 %v278, 1e-24
    %v315 = vmax.f32 %v281, 1e-24
    %v316 = vmax.f32 %v284, 1e-24
    %v317 = vmax.f32 %v287, 1e-24
    %v318 = vmax.f32 %v290, 1e-24
    %v319 = vmax.f32 %v293, 1e-24
    %v320 = vmax.f32 %v296, 1e-24
    %v321 = vmax.f32 %v299, 1e-24
    %v322 = vmax.f32 %v302, 1e-24
    %v323 = vmax.f32 %v305, 1e-24
    %v324 = vmax.f32 %v308, 1e-24
    %v325 = vrsqrt.pop %v309
    %v326 = vrsqrt.pop %v310
    %v327 = vrsqrt.pop %v311
    %v328 = vrsqrt.pop %v312
    %v329 = vrsqrt.pop %v313
    %v330 = vrsqrt.pop %v314
    %v331 = vrsqrt.pop %v315
    %v332 = vrsqrt.pop %v316
    %v333 = vrsqrt.pop %v317
    %v334 = vrsqrt.pop %v318
    %v335 = vrsqrt.pop %v319
    %v336 = vrsqrt.pop %v320
    %v337 = vrsqrt.pop %v321
    %v338 = vrsqrt.pop %v322
    %v339 = vrsqrt.pop %v323
    %v340 = vrsqrt.pop %v324
    %v341 = vmul.f32 %v325, 3.3333333
    %v342 = vmul.f32 %v326, 3.3333333
    %v343 = vmul.f32 %v327, 3.3333333
    %v344 = vmul.f32 %v328, 3.3333333
    %v345 = vmul.f32 %v329, 3.3333333
    %v346 = vmul.f32 %v330, 3.3333333
    %v347 = vmul.f32 %v331, 3.3333333
    %v348 = vmul.f32 %v332, 3.3333333
    %v349 = vmul.f32 %v333, 3.3333333
    %v350 = vmul.f32 %v334, 3.3333333
    %v351 = vmul.f32 %v335, 3.3333333
    %v352 = vmul.f32 %v336, 3.3333333
    %v353 = vmul.f32 %v337, 3.3333333
    %v354 = vmul.f32 %v338, 3.3333333
    %v355 = vmul.f32 %v339, 3.3333333
    %v356 = vmul.f32 %v340, 3.3333333
    %v357 = vmul.f32 %v167, %v341
    %v358 = vmul.f32 %v172, %v342
    %v359 = vmul.f32 %v177, %v343
    %v360 = vmul.f32 %v182, %v344
    %v361 = vmul.f32 %v187, %v345
    %v362 = vmul.f32 %v192, %v346
    %v363 = vmul.f32 %v197, %v347
    %v364 = vmul.f32 %v202, %v348
    %v365 = vmul.f32 %v207, %v349
    %v366 = vmul.f32 %v212, %v350
    %v367 = vmul.f32 %v217, %v351
    %v368 = vmul.f32 %v222, %v352
    %v369 = vmul.f32 %v227, %v353
    %v370 = vmul.f32 %v232, %v354
    %v371 = vmul.f32 %v237, %v355
    %v372 = vmul.f32 %v242, %v356
    %v373 = vmul.f32 %v357, 1.442695
    %v374 = vpow.pop %v373
    %v375 = vmul.f32 %v358, 1.442695
    %v376 = vpow.pop %v375
    %v377 = vmul.f32 %v359, 1.442695
    %v378 = vpow.pop %v377
    %v379 = vmul.f32 %v360, 1.442695
    %v380 = vpow.pop %v379
    %v381 = vmul.f32 %v361, 1.442695
    %v382 = vpow.pop %v381
    %v383 = vmul.f32 %v362, 1.442695
    %v384 = vpow.pop %v383
    %v385 = vmul.f32 %v363, 1.442695
    %v386 = vpow.pop %v385
    %v387 = vmul.f32 %v364, 1.442695
    %v388 = vpow.pop %v387
    %v389 = vmul.f32 %v365, 1.442695
    %v390 = vpow.pop %v389
    %v391 = vmul.f32 %v366, 1.442695
    %v392 = vpow.pop %v391
    %v393 = vmul.f32 %v367, 1.442695
    %v394 = vpow.pop %v393
    %v395 = vmul.f32 %v368, 1.442695
    %v396 = vpow.pop %v395
    %v397 = vmul.f32 %v369, 1.442695
    %v398 = vpow.pop %v397
    %v399 = vmul.f32 %v370, 1.442695
    %v400 = vpow.pop %v399
    %v401 = vmul.f32 %v371, 1.442695
    %v402 = vpow.pop %v401
    %v403 = vmul.f32 %v372, 1.442695
    %v404 = vpow.pop %v403
    %vm405 = vcmask 39936
    %v406 = vsel %vm405, %v374, 0.0
    %407 = vadd.xlane.f32.xlu0 %v406
    %v408 = vpop.xlane.xlu0 %407
    %v409 = vsel %vm405, %v376, 0.0
    %410 = vadd.xlane.f32.xlu0 %v409
    %v411 = vpop.xlane.xlu0 %410
    %v412 = vsel %vm405, %v378, 0.0
    %413 = vadd.xlane.f32.xlu0 %v412
    %v414 = vpop.xlane.xlu0 %413
    %v415 = vsel %vm405, %v380, 0.0
    %416 = vadd.xlane.f32.xlu0 %v415
    %v417 = vpop.xlane.xlu0 %416
    %v418 = vsel %vm405, %v382, 0.0
    %419 = vadd.xlane.f32.xlu0 %v418
    %v420 = vpop.xlane.xlu0 %419
    %v421 = vsel %vm405, %v384, 0.0
    %422 = vadd.xlane.f32.xlu0 %v421
    %v423 = vpop.xlane.xlu0 %422
    %v424 = vsel %vm405, %v386, 0.0
    %425 = vadd.xlane.f32.xlu0 %v424
    %v426 = vpop.xlane.xlu0 %425
    %v427 = vsel %vm405, %v388, 0.0
    %428 = vadd.xlane.f32.xlu0 %v427
    %v429 = vpop.xlane.xlu0 %428
    %v430 = vsel %vm405, %v390, 0.0
    %431 = vadd.xlane.f32.xlu0 %v430
    %v432 = vpop.xlane.xlu0 %431
    %v433 = vsel %vm405, %v392, 0.0
    %434 = vadd.xlane.f32.xlu0 %v433
    %v435 = vpop.xlane.xlu0 %434
    %v436 = vsel %vm405, %v394, 0.0
    %437 = vadd.xlane.f32.xlu0 %v436
    %v438 = vpop.xlane.xlu0 %437
    %v439 = vsel %vm405, %v396, 0.0
    %440 = vadd.xlane.f32.xlu0 %v439
    %v441 = vpop.xlane.xlu0 %440
    %v442 = vsel %vm405, %v398, 0.0
    %443 = vadd.xlane.f32.xlu0 %v442
    %v444 = vpop.xlane.xlu0 %443
    %v445 = vsel %vm405, %v400, 0.0
    %446 = vadd.xlane.f32.xlu0 %v445
    %v447 = vpop.xlane.xlu0 %446
    %v448 = vsel %vm405, %v402, 0.0
    %449 = vadd.xlane.f32.xlu0 %v448
    %v450 = vpop.xlane.xlu0 %449
    %v451 = vsel %vm405, %v404, 0.0
    %452 = vadd.xlane.f32.xlu0 %v451
    %v453 = vpop.xlane.xlu0 %452
    %v454 = vlog2.pop %v408
    %v455 = vmul.f32 %v454, 0.6931472
    %v456 = vlog2.pop %v411
    %v457 = vmul.f32 %v456, 0.6931472
    %v458 = vlog2.pop %v414
    %v459 = vmul.f32 %v458, 0.6931472
    %v460 = vlog2.pop %v417
    %v461 = vmul.f32 %v460, 0.6931472
    %v462 = vlog2.pop %v420
    %v463 = vmul.f32 %v462, 0.6931472
    %v464 = vlog2.pop %v423
    %v465 = vmul.f32 %v464, 0.6931472
    %v466 = vlog2.pop %v426
    %v467 = vmul.f32 %v466, 0.6931472
    %v468 = vlog2.pop %v429
    %v469 = vmul.f32 %v468, 0.6931472
    %v470 = vlog2.pop %v432
    %v471 = vmul.f32 %v470, 0.6931472
    %v472 = vlog2.pop %v435
    %v473 = vmul.f32 %v472, 0.6931472
    %v474 = vlog2.pop %v438
    %v475 = vmul.f32 %v474, 0.6931472
    %v476 = vlog2.pop %v441
    %v477 = vmul.f32 %v476, 0.6931472
    %v478 = vlog2.pop %v444
    %v479 = vmul.f32 %v478, 0.6931472
    %v480 = vlog2.pop %v447
    %v481 = vmul.f32 %v480, 0.6931472
    %v482 = vlog2.pop %v450
    %v483 = vmul.f32 %v482, 0.6931472
    %v484 = vlog2.pop %v453
    %v485 = vmul.f32 %v484, 0.6931472
    %v486 = vlaneseq
    %v487 = vand.u32 %v486, 127
    %488 = vset.pattern.permute.xlu0 0
    %489 = vperm.xlu0 %488, %v35
    %v490 = vpop.permute.xlu0 %489
    %491 = vset.pattern.permute.xlu0 0
    %492 = vperm.xlu0 %491, %v36
    %v493 = vpop.permute.xlu0 %492
    %494 = vset.pattern.permute.xlu0 0
    %495 = vperm.xlu0 %494, %v37
    %v496 = vpop.permute.xlu0 %495
    %497 = vset.pattern.permute.xlu0 0
    %498 = vperm.xlu0 %497, %v38
    %v499 = vpop.permute.xlu0 %498
    %500 = vset.pattern.permute.xlu0 0
    %501 = vperm.xlu0 %500, %v39
    %v502 = vpop.permute.xlu0 %501
    %503 = vset.pattern.permute.xlu0 0
    %504 = vperm.xlu0 %503, %v40
    %v505 = vpop.permute.xlu0 %504
    %506 = vset.pattern.permute.xlu0 0
    %507 = vperm.xlu0 %506, %v41
    %v508 = vpop.permute.xlu0 %507
    %509 = vset.pattern.permute.xlu0 0
    %510 = vperm.xlu0 %509, %v42
    %v511 = vpop.permute.xlu0 %510
    %512 = vset.pattern.permute.xlu0 0
    %513 = vperm.xlu0 %512, %v43
    %v514 = vpop.permute.xlu0 %513
    %515 = vset.pattern.permute.xlu0 0
    %516 = vperm.xlu0 %515, %v44
    %v517 = vpop.permute.xlu0 %516
    %518 = vset.pattern.permute.xlu0 0
    %519 = vperm.xlu0 %518, %v45
    %v520 = vpop.permute.xlu0 %519
    %521 = vset.pattern.permute.xlu0 0
    %522 = vperm.xlu0 %521, %v46
    %v523 = vpop.permute.xlu0 %522
    %524 = vset.pattern.permute.xlu0 0
    %525 = vperm.xlu0 %524, %v47
    %v526 = vpop.permute.xlu0 %525
    %527 = vset.pattern.permute.xlu0 0
    %528 = vperm.xlu0 %527, %v48
    %v529 = vpop.permute.xlu0 %528
    %530 = vset.pattern.permute.xlu0 0
    %531 = vperm.xlu0 %530, %v49
    %v532 = vpop.permute.xlu0 %531
    %533 = vset.pattern.permute.xlu0 0
    %534 = vperm.xlu0 %533, %v50
    %v535 = vpop.permute.xlu0 %534
    %vm536 = vcmp.eq.s32.totalorder %v487, %v490
    %vm537 = vcmp.eq.s32.totalorder %v487, %v493
    %vm538 = vcmp.eq.s32.totalorder %v487, %v496
    %vm539 = vcmp.eq.s32.totalorder %v487, %v499
    %vm540 = vcmp.eq.s32.totalorder %v487, %v502
    %vm541 = vcmp.eq.s32.totalorder %v487, %v505
    %vm542 = vcmp.eq.s32.totalorder %v487, %v508
    %vm543 = vcmp.eq.s32.totalorder %v487, %v511
    %vm544 = vcmp.eq.s32.totalorder %v487, %v514
    %vm545 = vcmp.eq.s32.totalorder %v487, %v517
    %vm546 = vcmp.eq.s32.totalorder %v487, %v520
    %vm547 = vcmp.eq.s32.totalorder %v487, %v523
    %vm548 = vcmp.eq.s32.totalorder %v487, %v526
    %vm549 = vcmp.eq.s32.totalorder %v487, %v529
    %vm550 = vcmp.eq.s32.totalorder %v487, %v532
    %vm551 = vcmp.eq.s32.totalorder %v487, %v535
    %v552 = vsel %vm536, 1, 0
    %v553 = vsel %vm537, 1, 0
    %v554 = vsel %vm538, 1, 0
    %v555 = vsel %vm539, 1, 0
    %v556 = vsel %vm540, 1, 0
    %v557 = vsel %vm541, 1, 0
    %v558 = vsel %vm542, 1, 0
    %v559 = vsel %vm543, 1, 0
    %v560 = vsel %vm544, 1, 0
    %v561 = vsel %vm545, 1, 0
    %v562 = vsel %vm546, 1, 0
    %v563 = vsel %vm547, 1, 0
    %v564 = vsel %vm548, 1, 0
    %v565 = vsel %vm549, 1, 0
    %v566 = vsel %vm550, 1, 0
    %v567 = vsel %vm551, 1, 0
    %v568 = vcvt.s32.f32 %v552
    %v569 = vcvt.s32.f32 %v553
    %v570 = vcvt.s32.f32 %v554
    %v571 = vcvt.s32.f32 %v555
    %v572 = vcvt.s32.f32 %v556
    %v573 = vcvt.s32.f32 %v557
    %v574 = vcvt.s32.f32 %v558
    %v575 = vcvt.s32.f32 %v559
    %v576 = vcvt.s32.f32 %v560
    %v577 = vcvt.s32.f32 %v561
    %v578 = vcvt.s32.f32 %v562
    %v579 = vcvt.s32.f32 %v563
    %v580 = vcvt.s32.f32 %v564
    %v581 = vcvt.s32.f32 %v565
    %v582 = vcvt.s32.f32 %v566
    %v583 = vcvt.s32.f32 %v567
    %v584 = vmul.f32 %v357, %v568
    %v585 = vmul.f32 %v358, %v569
    %v586 = vmul.f32 %v359, %v570
    %v587 = vmul.f32 %v360, %v571
    %v588 = vmul.f32 %v361, %v572
    %v589 = vmul.f32 %v362, %v573
    %v590 = vmul.f32 %v363, %v574
    %v591 = vmul.f32 %v364, %v575
    %v592 = vmul.f32 %v365, %v576
    %v593 = vmul.f32 %v366, %v577
    %v594 = vmul.f32 %v367, %v578
    %v595 = vmul.f32 %v368, %v579
    %v596 = vmul.f32 %v369, %v580
    %v597 = vmul.f32 %v370, %v581
    %v598 = vmul.f32 %v371, %v582
    %v599 = vmul.f32 %v372, %v583
    %v600 = vsel %vm405, %v584, 0.0
    %601 = vadd.xlane.f32.xlu0 %v600
    %v602 = vpop.xlane.xlu0 %601
    %v603 = vsel %vm405, %v585, 0.0
    %604 = vadd.xlane.f32.xlu0 %v603
    %v605 = vpop.xlane.xlu0 %604
    %v606 = vsel %vm405, %v586, 0.0
    %607 = vadd.xlane.f32.xlu0 %v606
    %v608 = vpop.xlane.xlu0 %607
    %v609 = vsel %vm405, %v587, 0.0
    %610 = vadd.xlane.f32.xlu0 %v609
    %v611 = vpop.xlane.xlu0 %610
    %v612 = vsel %vm405, %v588, 0.0
    %613 = vadd.xlane.f32.xlu0 %v612
    %v614 = vpop.xlane.xlu0 %613
    %v615 = vsel %vm405, %v589, 0.0
    %616 = vadd.xlane.f32.xlu0 %v615
    %v617 = vpop.xlane.xlu0 %616
    %v618 = vsel %vm405, %v590, 0.0
    %619 = vadd.xlane.f32.xlu0 %v618
    %v620 = vpop.xlane.xlu0 %619
    %v621 = vsel %vm405, %v591, 0.0
    %622 = vadd.xlane.f32.xlu0 %v621
    %v623 = vpop.xlane.xlu0 %622
    %v624 = vsel %vm405, %v592, 0.0
    %625 = vadd.xlane.f32.xlu0 %v624
    %v626 = vpop.xlane.xlu0 %625
    %v627 = vsel %vm405, %v593, 0.0
    %628 = vadd.xlane.f32.xlu0 %v627
    %v629 = vpop.xlane.xlu0 %628
    %v630 = vsel %vm405, %v594, 0.0
    %631 = vadd.xlane.f32.xlu0 %v630
    %v632 = vpop.xlane.xlu0 %631
    %v633 = vsel %vm405, %v595, 0.0
    %634 = vadd.xlane.f32.xlu0 %v633
    %v635 = vpop.xlane.xlu0 %634
    %v636 = vsel %vm405, %v596, 0.0
    %637 = vadd.xlane.f32.xlu0 %v636
    %v638 = vpop.xlane.xlu0 %637
    %v639 = vsel %vm405, %v597, 0.0
    %640 = vadd.xlane.f32.xlu0 %v639
    %v641 = vpop.xlane.xlu0 %640
    %v642 = vsel %vm405, %v598, 0.0
    %643 = vadd.xlane.f32.xlu0 %v642
    %v644 = vpop.xlane.xlu0 %643
    %v645 = vsel %vm405, %v599, 0.0
    %646 = vadd.xlane.f32.xlu0 %v645
    %v647 = vpop.xlane.xlu0 %646
    %v648 = vsub.f32 %v455, %v602
    %v649 = vsub.f32 %v457, %v605
    %v650 = vsub.f32 %v459, %v608
    %v651 = vsub.f32 %v461, %v611
    %v652 = vsub.f32 %v463, %v614
    %v653 = vsub.f32 %v465, %v617
    %v654 = vsub.f32 %v467, %v620
    %v655 = vsub.f32 %v469, %v623
    %v656 = vsub.f32 %v471, %v626
    %v657 = vsub.f32 %v473, %v629
    %v658 = vsub.f32 %v475, %v632
    %v659 = vsub.f32 %v477, %v635
    %v660 = vsub.f32 %v479, %v638
    %v661 = vsub.f32 %v481, %v641
    %v662 = vsub.f32 %v483, %v644
    %v663 = vsub.f32 %v485, %v647
    %vm664 = vcmp.ne.s32.totalorder %v35, 4294967295
    %vm665 = vcmp.ne.s32.totalorder %v36, 4294967295
    %vm666 = vcmp.ne.s32.totalorder %v37, 4294967295
    %vm667 = vcmp.ne.s32.totalorder %v38, 4294967295
    %vm668 = vcmp.ne.s32.totalorder %v39, 4294967295
    %vm669 = vcmp.ne.s32.totalorder %v40, 4294967295
    %vm670 = vcmp.ne.s32.totalorder %v41, 4294967295
    %vm671 = vcmp.ne.s32.totalorder %v42, 4294967295
    %vm672 = vcmp.ne.s32.totalorder %v43, 4294967295
    %vm673 = vcmp.ne.s32.totalorder %v44, 4294967295
    %vm674 = vcmp.ne.s32.totalorder %v45, 4294967295
    %vm675 = vcmp.ne.s32.totalorder %v46, 4294967295
    %vm676 = vcmp.ne.s32.totalorder %v47, 4294967295
    %vm677 = vcmp.ne.s32.totalorder %v48, 4294967295
    %vm678 = vcmp.ne.s32.totalorder %v49, 4294967295
    %vm679 = vcmp.ne.s32.totalorder %v50, 4294967295
    %v680 = vsel %vm664, %v648, 0.0
    %v681 = vsel %vm665, %v649, 0.0
    %v682 = vsel %vm666, %v650, 0.0
    %v683 = vsel %vm667, %v651, 0.0
    %v684 = vsel %vm668, %v652, 0.0
    %v685 = vsel %vm669, %v653, 0.0
    %v686 = vsel %vm670, %v654, 0.0
    %v687 = vsel %vm671, %v655, 0.0
    %v688 = vsel %vm672, %v656, 0.0
    %v689 = vsel %vm673, %v657, 0.0
    %v690 = vsel %vm674, %v658, 0.0
    %v691 = vsel %vm675, %v659, 0.0
    %v692 = vsel %vm676, %v660, 0.0
    %v693 = vsel %vm677, %v661, 0.0
    %v694 = vsel %vm678, %v662, 0.0
    %v695 = vsel %vm679, %v663, 0.0
    %vm696 = vcmask 7168
    %v697 = vsel %vm696, %v680, 0.0
    %v698 = vsel %vm696, %v681, 0.0
    %v699 = vadd.f32 %v697, %v698
    %v700 = vsel %vm696, %v682, 0.0
    %v701 = vadd.f32 %v699, %v700
    %v702 = vsel %vm696, %v683, 0.0
    %v703 = vadd.f32 %v701, %v702
    %v704 = vsel %vm696, %v684, 0.0
    %v705 = vadd.f32 %v703, %v704
    %v706 = vsel %vm696, %v685, 0.0
    %v707 = vadd.f32 %v705, %v706
    %v708 = vsel %vm696, %v686, 0.0
    %v709 = vadd.f32 %v707, %v708
    %v710 = vsel %vm696, %v687, 0.0
    %v711 = vadd.f32 %v709, %v710
    %v712 = vsel %vm696, %v688, 0.0
    %v713 = vadd.f32 %v711, %v712
    %v714 = vsel %vm696, %v689, 0.0
    %v715 = vadd.f32 %v713, %v714
    %v716 = vsel %vm696, %v690, 0.0
    %v717 = vadd.f32 %v715, %v716
    %v718 = vsel %vm696, %v691, 0.0
    %v719 = vadd.f32 %v717, %v718
    %v720 = vsel %vm696, %v692, 0.0
    %v721 = vadd.f32 %v719, %v720
    %v722 = vsel %vm696, %v693, 0.0
    %v723 = vadd.f32 %v721, %v722
    %v724 = vsel %vm696, %v694, 0.0
    %v725 = vadd.f32 %v723, %v724
    %v726 = vsel %vm696, %v695, 0.0
    %v727 = vadd.f32 %v725, %v726
    %728 = vadd.xlane.f32.xlu0 %v727
    %v729 = vpop.xlane.xlu0 %728
    %v730 = vrot.slane %v729, 4
    %v731 = vadd.f32 %v729, %v730
    %v732 = vrot.slane %v731, 2
    %v733 = vadd.f32 %v731, %v732
    %v734 = vrot.slane %v733, 1
    %v735 = vadd.f32 %v733, %v734
    %s736 = vtos %v735
    %v737 = vsel %vm664, 1, 0
    %v738 = vsel %vm665, 1, 0
    %v739 = vsel %vm666, 1, 0
    %v740 = vsel %vm667, 1, 0
    %v741 = vsel %vm668, 1, 0
    %v742 = vsel %vm669, 1, 0
    %v743 = vsel %vm670, 1, 0
    %v744 = vsel %vm671, 1, 0
    %v745 = vsel %vm672, 1, 0
    %v746 = vsel %vm673, 1, 0
    %v747 = vsel %vm674, 1, 0
    %v748 = vsel %vm675, 1, 0
    %v749 = vsel %vm676, 1, 0
    %v750 = vsel %vm677, 1, 0
    %v751 = vsel %vm678, 1, 0
    %v752 = vsel %vm679, 1, 0
    %v753 = vcvt.s32.f32 %v737
    %v754 = vcvt.s32.f32 %v738
    %v755 = vcvt.s32.f32 %v739
    %v756 = vcvt.s32.f32 %v740
    %v757 = vcvt.s32.f32 %v741
    %v758 = vcvt.s32.f32 %v742
    %v759 = vcvt.s32.f32 %v743
    %v760 = vcvt.s32.f32 %v744
    %v761 = vcvt.s32.f32 %v745
    %v762 = vcvt.s32.f32 %v746
    %v763 = vcvt.s32.f32 %v747
    %v764 = vcvt.s32.f32 %v748
    %v765 = vcvt.s32.f32 %v749
    %v766 = vcvt.s32.f32 %v750
    %v767 = vcvt.s32.f32 %v751
    %v768 = vcvt.s32.f32 %v752
    %v769 = vsel %vm696, %v753, 0.0
    %v770 = vsel %vm696, %v754, 0.0
    %v771 = vadd.f32 %v769, %v770
    %v772 = vsel %vm696, %v755, 0.0
    %v773 = vadd.f32 %v771, %v772
    %v774 = vsel %vm696, %v756, 0.0
    %v775 = vadd.f32 %v773, %v774
    %v776 = vsel %vm696, %v757, 0.0
    %v777 = vadd.f32 %v775, %v776
    %v778 = vsel %vm696, %v758, 0.0
    %v779 = vadd.f32 %v777, %v778
    %v780 = vsel %vm696, %v759, 0.0
    %v781 = vadd.f32 %v779, %v780
    %v782 = vsel %vm696, %v760, 0.0
    %v783 = vadd.f32 %v781, %v782
    %v784 = vsel %vm696, %v761, 0.0
    %v785 = vadd.f32 %v783, %v784
    %v786 = vsel %vm696, %v762, 0.0
    %v787 = vadd.f32 %v785, %v786
    %v788 = vsel %vm696, %v763, 0.0
    %v789 = vadd.f32 %v787, %v788
    %v790 = vsel %vm696, %v764, 0.0
    %v791 = vadd.f32 %v789, %v790
    %v792 = vsel %vm696, %v765, 0.0
    %v793 = vadd.f32 %v791, %v792
    %v794 = vsel %vm696, %v766, 0.0
    %v795 = vadd.f32 %v793, %v794
    %v796 = vsel %vm696, %v767, 0.0
    %v797 = vadd.f32 %v795, %v796
    %v798 = vsel %vm696, %v768, 0.0
    %v799 = vadd.f32 %v797, %v798
    %800 = vadd.xlane.f32.xlu0 %v799
    %v801 = vpop.xlane.xlu0 %800
    %v802 = vrot.slane %v801, 4
    %v803 = vadd.f32 %v801, %v802
    %v804 = vrot.slane %v803, 2
    %v805 = vadd.f32 %v803, %v804
    %v806 = vrot.slane %v805, 1
    %v807 = vadd.f32 %v805, %v806
    %s808 = vtos %v807
    %v809 = vlaneseq
    %v810 = vshrl.u32 %v809, 7
    %vm811 = vcmp.eq.s32.totalorder %v810, 0
    %vm812 = vcmp.eq.s32.totalorder %v487, 0
    %vm813 = vmand %vm811, %vm812
    %vm814 = vcmp.eq.s32.totalorder %v487, 1
    %vm815 = vmand %vm811, %vm814
    %v816 = vstv %s808
    %v817 = vsel %vm815, %v816, 0.0
    %v818 = vstv %s736
    %v819 = vsel %vm813, %v818, %v817
    %820 = vst [vmem:[#allocation2] sm:$0xff] %v819
    // Predicated region
    $region14: #{tpu_custom_call.1} parent=1 // pred_check
      _
    $region15: #{tpu_custom_call.1} parent=1 // pred_check_branch
      %822 = sbr.rel (0) target = $region17
    $region16: #{tpu_custom_call.1} parent=1 // pred_region
      %s824 = ssub.s32 128, 128
      %825 = vsyncadd [#allocation3], %s824
      %s827 = sshll.u32 [#allocation2], 4
      %s828 = int_to_ptr.vmem [resolvable:$true] %s827
      %830 = dma.vmem_to_hbm [thread:$0]  %s828, 128, %s3, [#allocation3]
    $region17: #{tpu_custom_call.1} parent=1 // pred_fallthru
      _
    // Predicated region
    $region18: #{tpu_custom_call.1} parent=1 // pred_check
      _
    $region19: #{tpu_custom_call.1} parent=1 // pred_check_branch
      %832 = sbr.rel (0) target = $region21
    $region20: #{tpu_custom_call.1} parent=1 // pred_region
      %833 = dma.done [#allocation3], 128
    $region21: #{tpu_custom_call.1} parent=1 // pred_fallthru
      _
    %834 = vsyncpa [#allocation3], 1

</llo_original>
